<compile_context>
chip_gen: v7x
topology: tpu7x:2x2x1
jax: 0.10.0
libtpu: 0.0.40
codegen_flags: <defaults>
</compile_context>

<pallas_src>
import jax
import jax.numpy as jnp
from jax.experimental import pallas as pl
from jax.experimental.pallas import tpu as pltpu

NUM_INPUTS = 4      # CartPole observation dimension
OUTPUT_SIZE = 32    # hidden / action-feature size
O_CLUST = 8         # o_num_clustering
H_CLUST = 5         # h_num_clustering
BATCH = 8

LANES = 128
SUB = 8             # sublane replication for bias rows

# ---- input-slab lane offsets ----
IN_X, IN_HID, IN_MASK = 0, 32, 64

# ---- fused-head output column offsets (w_head is (128, 256)) ----
FC_E1, FC_DX, FC_GH = 0, 32, 128

# ---- weight slab row offsets (all multiples of 8) ----
RW_WE2, RW_WOP, RW_WX, RW_WHP = 0, 32, 64, 72
RW_WD1H, RW_WD2, RW_WAC1, RW_WAC2 = 104, 112, 144, 176
W_ROWS = 240

# ---- bias slab row-block offsets (each block = 8 replicated sublanes) ----
RB_BE1, RB_BE2, RB_BOP, RB_BIH, RB_BHH, RB_BHP = 0, 8, 16, 24, 32, 40
RB_BD1, RB_BD2, RB_BAC1, RB_BAC2, RB_WCL, RB_BCL = 48, 56, 64, 72, 80, 88
B_ROWS = 96

# ---- output slab lane offsets: [actor | hidden | op | hp | values | pad] ----
OUT_A, OUT_H, OUT_OP, OUT_HP, OUT_V = 0, 32, 64, 72, 77


def _sigmoid(x):
    # sigmoid(x) = 0.5 * (1 + tanh(x/2))  -- tanh runs on the EUP slot
    return 0.5 * jnp.tanh(0.5 * x) + 0.5


def _softmax(x):
    m = jnp.max(x, axis=-1, keepdims=True)
    e = jnp.exp(x - m)
    d = jnp.sum(e, axis=-1, keepdims=True)
    r = pl.reciprocal(d, approx=True)
    r = r * (2.0 - d * r)          # one Newton step: ~f32 accuracy, 2 cheap VPU ops
    return e * r


def _forward_body(xs, wh_ref, w_ref, b_ref):
    """Shared math for the single-step and rollout kernels.

    xs: (B, 128) input slab -- x@0:4, hidden@32:64, mask(replicated)@64:96, zeros else.
    Returns (out_slab (B,128), h1 (B,32)).
    """
    f32 = jnp.float32
    H = OUTPUT_SIZE
    B = xs.shape[0]

    def bias(row, n=None):
        if n is None:
            return b_ref[row:row + B, :]          # full 128 lanes (zero padded)
        return b_ref[row:row + B, 0:n]

    hid = xs[:, IN_HID:IN_HID + H]
    m32 = xs[:, IN_MASK:IN_MASK + H]
    h0 = hid * m32                                # masked hidden (needed late, for h1)

    # --- fused head: [x@We1 | x@Wd1X | ... | hidden@Wh(r|z|n)] in ONE MXU pass ---
    fused = jnp.dot(xs, wh_ref[...], preferred_element_type=f32)        # (B, 256)
    dx = fused[:, FC_DX:FC_DX + H]                # D2C first-layer x-path (used later)

    # --- embedding: Linear -> tanh -> Linear -> tanh ---
    e = jnp.tanh(fused[:, FC_E1:FC_E1 + H] + bias(RB_BE1, H))
    e = jnp.tanh(jnp.dot(e, w_ref[RW_WE2:RW_WE2 + H, 0:H],
                         preferred_element_type=f32) + bias(RB_BE2, H))

    # --- obsprojection: Linear -> softmax (exact 8-lane logits: no padded lanes) ---
    op = _softmax(jnp.dot(e, w_ref[RW_WOP:RW_WOP + H, 0:O_CLUST],
                          preferred_element_type=f32) + bias(RB_BOP, O_CLUST))

    # --- rnnblock: single-step GRU, gates packed [r|z|n] along lanes ---
    # input path: full-lane RHS (output is lane-sliced anyway; bias zero-padded)
    gx = jnp.dot(op, w_ref[RW_WX:RW_WX + O_CLUST, :],
                 preferred_element_type=f32) + bias(RB_BIH)
    # hidden path: (mask*h)@Wh == mask*(h@Wh); bias added after the mask
    ghr = m32 * fused[:, FC_GH + 0 * H:FC_GH + 1 * H] + b_ref[RB_BHH:RB_BHH + B, 0:H]
    ghz = m32 * fused[:, FC_GH + 1 * H:FC_GH + 2 * H] + b_ref[RB_BHH:RB_BHH + B, H:2 * H]
    ghn = m32 * fused[:, FC_GH + 2 * H:FC_GH + 3 * H] + b_ref[RB_BHH:RB_BHH + B, 2 * H:3 * H]
    r = _sigmoid(gx[:, 0:H] + ghr)
    z = _sigmoid(gx[:, H:2 * H] + ghz)
    n = jnp.tanh(gx[:, 2 * H:3 * H] + r * ghn)
    h1 = (1.0 - z) * n + z * h0                   # new hidden == hidden_action

    # --- hiddenprojection: Linear -> softmax (exact 5-lane logits) ---
    hp = _softmax(jnp.dot(h1, w_ref[RW_WHP:RW_WHP + H, 0:H_CLUST],
                          preferred_element_type=f32) + bias(RB_BHP, H_CLUST))

    # --- D2C_layer on concat(inputs, hp): relu(x@Wd1x + hp@Wd1h + b) -> relu(.@Wd2 + b)
    d = jnp.maximum(dx + jnp.dot(hp, w_ref[RW_WD1H:RW_WD1H + H_CLUST, 0:H],
                                 preferred_element_type=f32) + bias(RB_BD1, H), 0.0)
    d = jnp.maximum(jnp.dot(d, w_ref[RW_WD2:RW_WD2 + H, 0:H],
                            preferred_element_type=f32) + bias(RB_BD2, H), 0.0)

    # --- fused actor|critic heads ---
    ac = jnp.tanh(jnp.dot(d, w_ref[RW_WAC1:RW_WAC1 + H, 0:2 * H],
                          preferred_element_type=f32) + bias(RB_BAC1, 2 * H))
    ac = jnp.tanh(jnp.dot(ac, w_ref[RW_WAC2:RW_WAC2 + 2 * H, :],      # full lanes
                          preferred_element_type=f32) + bias(RB_BAC2))
    a = ac[:, 0:H]            # feature_actor
    c = ac[:, H:2 * H]        # hidden_critic

    # --- critic_linear as VPU multiply + lane reduce (weight pre-replicated per sublane)
    v = jnp.sum(c * b_ref[RB_WCL:RB_WCL + B, 0:H], axis=-1, keepdims=True) \
        + b_ref[RB_BCL:RB_BCL + B, 0:1]

    # --- lane-dense output slab: [actor | hidden | op | hp | values | pad] ---
    pad = jnp.zeros((B, LANES - (2 * H + O_CLUST + H_CLUST + 1)), f32)
    out = jnp.concatenate([a, h1, op, hp, v, pad], axis=-1)
    return out, h1


def step_kernel(xs_ref, wh_ref, w_ref, b_ref, out_ref):
    out, _ = _forward_body(xs_ref[...], wh_ref, w_ref, b_ref)
    out_ref[...] = out


def rollout_kernel(xs_ref, h0_ref, wh_ref, w_ref, b_ref, out_ref, h_scr):
    B = h0_ref.shape[0]

    @pl.when(pl.program_id(0) == 0)
    def _():
        h_scr[...] = h0_ref[...]

    # xs has zeros at the hidden lanes; h_scr has zeros everywhere else -> one vadd.
    out, h1 = _forward_body(xs_ref[0] + h_scr[...], wh_ref, w_ref, b_ref)
    out_ref[0] = out
    h_scr[...] = jnp.concatenate(
        [jnp.zeros((B, IN_HID), jnp.float32), h1,
         jnp.zeros((B, LANES - IN_HID - OUTPUT_SIZE), jnp.float32)], axis=-1)


# ----------------------------------------------------------------------------
# Host-side parameter construction / packing
# ----------------------------------------------------------------------------
def make_params(key):
    """Deterministic synthetic parameters (stand-in for the digideep init)."""
    keys = iter(jax.random.split(key, 64))

    def w(fan_in, fan_out):
        return jax.random.normal(next(keys), (fan_in, fan_out), jnp.float32) / jnp.sqrt(float(fan_in))

    def bvec(n):
        return 0.1 * jax.random.normal(next(keys), (1, n), jnp.float32)

    H = OUTPUT_SIZE
    p = {}
    p['we1'], p['be1'] = w(NUM_INPUTS, H), bvec(H)
    p['we2'], p['be2'] = w(H, H), bvec(H)
    p['wop'], p['bop'] = w(H, O_CLUST), bvec(O_CLUST)
    p['wxr'], p['wxz'], p['wxn'] = w(O_CLUST, H), w(O_CLUST, H), w(O_CLUST, H)
    p['whr'], p['whz'], p['whn'] = w(H, H), w(H, H), w(H, H)
    p['b_ir'], p['b_iz'], p['b_in'] = bvec(H), bvec(H), bvec(H)
    p['b_hr'], p['b_hz'], p['b_hn'] = bvec(H), bvec(H), bvec(H)
    p['whp'], p['bhp'] = w(H, H_CLUST), bvec(H_CLUST)
    p['wd1x'] = w(NUM_INPUTS, H)                  # D2C first-layer weight, inputs part
    p['wd1h'], p['bd1'] = w(H_CLUST, H), bvec(H)  # D2C first-layer weight, hp part
    p['wd2'], p['bd2'] = w(H, H), bvec(H)
    p['wa1'], p['ba1'] = w(H, H), bvec(H)
    p['wa2'], p['ba2'] = w(H, H), bvec(H)
    p['wc1'], p['bc1'] = w(H, H), bvec(H)
    p['wc2'], p['bc2'] = w(H, H), bvec(H)
    p['wcl'], p['bcl'] = w(H, 1), bvec(1)
    return p


def pack_params(p):
    """Pack parameters into the fused-head weight, the weight slab and the bias slab."""
    f32 = jnp.float32
    H = OUTPUT_SIZE

    # --- fused head weight (128, 256): rows match input-slab lanes, cols = fused output
    wh = jnp.zeros((LANES, 2 * LANES), f32)
    wh = wh.at[0:NUM_INPUTS, FC_E1:FC_E1 + H].set(p['we1'])
    wh = wh.at[0:NUM_INPUTS, FC_DX:FC_DX + H].set(p['wd1x'])
    whid = jnp.concatenate([p['whr'], p['whz'], p['whn']], axis=1)        # (32, 96)
    wh = wh.at[IN_HID:IN_HID + H, FC_GH:FC_GH + 3 * H].set(whid)

    # --- weight slab (W_ROWS, 128) ---
    def pad_block(wm, rows):
        return jnp.pad(wm, ((0, rows - wm.shape[0]), (0, LANES - wm.shape[1])))

    wx = jnp.concatenate([p['wxr'], p['wxz'], p['wxn']], axis=1)          # (8, 96)
    wac1 = jnp.concatenate([p['wa1'], p['wc1']], axis=1)                  # (32, 64)
    z32 = jnp.zeros((H, H), f32)
    wac2 = jnp.concatenate([jnp.concatenate([p['wa2'], z32], axis=1),
                            jnp.concatenate([z32, p['wc2']], axis=1)], axis=0)  # (64, 64)
    w_slab = jnp.concatenate([
        pad_block(p['we2'], 32),     # RW_WE2  = 0
        pad_block(p['wop'], 32),     # RW_WOP  = 32
        pad_block(wx, 8),            # RW_WX   = 64
        pad_block(p['whp'], 32),     # RW_WHP  = 72
        pad_block(p['wd1h'], 8),     # RW_WD1H = 104
        pad_block(p['wd2'], 32),     # RW_WD2  = 112
        pad_block(wac1, 32),         # RW_WAC1 = 144
        pad_block(wac2, 64),         # RW_WAC2 = 176
    ], axis=0)
    assert w_slab.shape == (W_ROWS, LANES)

    # --- bias slab: each row zero-padded to 128 lanes and replicated over 8 sublanes ---
    def brow(v):
        r = jnp.pad(v, ((0, 0), (0, LANES - v.shape[1])))
        return jnp.tile(r, (SUB, 1))

    b_ih = jnp.concatenate([p['b_ir'], p['b_iz'], p['b_in']], axis=1)     # (1, 96)
    b_hh = jnp.concatenate([p['b_hr'], p['b_hz'], p['b_hn']], axis=1)     # (1, 96)
    bac1 = jnp.concatenate([p['ba1'], p['bc1']], axis=1)                  # (1, 64)
    bac2 = jnp.concatenate([p['ba2'], p['bc2']], axis=1)                  # (1, 64)
    b_slab = jnp.concatenate([
        brow(p['be1']), brow(p['be2']), brow(p['bop']),
        brow(b_ih), brow(b_hh), brow(p['bhp']),
        brow(p['bd1']), brow(p['bd2']), brow(bac1), brow(bac2),
        brow(p['wcl'].T), brow(p['bcl'])], axis=0)
    assert b_slab.shape == (B_ROWS, LANES)
    return wh, w_slab, b_slab


def pack_inputs(inputs, hidden, masks):
    """(B,128) input slab: x@0:4, hidden@32:64, mask replicated@64:96, zeros elsewhere."""
    B = inputs.shape[0]
    f32 = jnp.float32
    return jnp.concatenate([
        inputs.astype(f32),
        jnp.zeros((B, IN_HID - NUM_INPUTS), f32),
        hidden.astype(f32),
        jnp.broadcast_to(masks.astype(f32), (B, OUTPUT_SIZE)),
        jnp.zeros((B, LANES - IN_MASK - OUTPUT_SIZE), f32)], axis=-1)


# ----------------------------------------------------------------------------
# Wrappers
# ----------------------------------------------------------------------------
def _slice_outputs(out):
    H = OUTPUT_SIZE
    values = out[..., OUT_V:OUT_V + 1]
    feature_actor = out[..., OUT_A:OUT_A + H]
    hidden_out = out[..., OUT_H:OUT_H + H]
    op = out[..., OUT_OP:OUT_OP + O_CLUST]
    hp = out[..., OUT_HP:OUT_HP + H_CLUST]
    return values, feature_actor, hidden_out, op, hp, hidden_out


def mlpmodel_forward(inputs, hidden, masks, w_head, w_slab, b_slab):
    """Single-step forward, matching MLPModel.forward(inputs, hidden, masks)."""
    B = inputs.shape[0]
    assert B <= SUB, "bias slab is replicated over 8 sublanes; B must be <= 8"
    xs = pack_inputs(inputs, hidden, masks)
    out = pl.pallas_call(
        step_kernel,
        out_shape=jax.ShapeDtypeStruct((B, LANES), jnp.float32),
        in_specs=[pl.BlockSpec(memory_space=pltpu.MemorySpace.VMEM) for _ in range(4)],
        out_specs=pl.BlockSpec(memory_space=pltpu.MemorySpace.VMEM),
    )(xs, w_head, w_slab, b_slab)
    return _slice_outputs(out)


def mlpmodel_rollout(inputs_seq, hidden0, masks_seq, w_head, w_slab, b_slab):
    """T-step rollout: weights stay VMEM-resident, hidden carried in VMEM scratch."""
    T, B, _ = inputs_seq.shape
    assert B <= SUB
    f32 = jnp.float32
    xs_seq = jnp.concatenate([
        inputs_seq.astype(f32),
        jnp.zeros((T, B, IN_HID - NUM_INPUTS), f32),
        jnp.zeros((T, B, OUTPUT_SIZE), f32),                 # hidden slot (VMEM-carried)
        jnp.broadcast_to(masks_seq.astype(f32), (T, B, OUTPUT_SIZE)),
        jnp.zeros((T, B, LANES - IN_MASK - OUTPUT_SIZE), f32)], axis=-1)
    h0_slab = jnp.concatenate([
        jnp.zeros((B, IN_HID), f32), hidden0.astype(f32),
        jnp.zeros((B, LANES - IN_HID - OUTPUT_SIZE), f32)], axis=-1)

    out = pl.pallas_call(
        rollout_kernel,
        out_shape=jax.ShapeDtypeStruct((T, B, LANES), jnp.float32),
        grid=(T,),
        in_specs=[
            pl.BlockSpec((1, B, LANES), lambda t: (t, 0, 0)),          # per-step input slab
            pl.BlockSpec((B, LANES), lambda t: (0, 0)),                # initial hidden slab
            pl.BlockSpec((LANES, 2 * LANES), lambda t: (0, 0)),        # fused head (resident)
            pl.BlockSpec((W_ROWS, LANES), lambda t: (0, 0)),           # weight slab (resident)
            pl.BlockSpec((B_ROWS, LANES), lambda t: (0, 0)),           # bias slab (resident)
        ],
        out_specs=pl.BlockSpec((1, B, LANES), lambda t: (t, 0, 0)),
        scratch_shapes=[pltpu.VMEM((B, LANES), jnp.float32)],
        compiler_params=pltpu.CompilerParams(dimension_semantics=("arbitrary",)),
    )(xs_seq, h0_slab, w_head, w_slab, b_slab)
    return _slice_outputs(out)


# ----------------------------------------------------------------------------
# Pure-JAX reference (unpacked params) for validation
# ----------------------------------------------------------------------------
def mlpmodel_reference(inputs, hidden, masks, p):
    def softmax(x):
        m = jnp.max(x, axis=-1, keepdims=True)
        e = jnp.exp(x - m)
        return e / jnp.sum(e, axis=-1, keepdims=True)

    sig = jax.nn.sigmoid
    x = inputs
    h0 = hidden * masks
    e = jnp.tanh(x @ p['we1'] + p['be1'])
    e = jnp.tanh(e @ p['we2'] + p['be2'])
    op = softmax(e @ p['wop'] + p['bop'])
    r = sig(op @ p['wxr'] + p['b_ir'] + h0 @ p['whr'] + p['b_hr'])
    z = sig(op @ p['wxz'] + p['b_iz'] + h0 @ p['whz'] + p['b_hz'])
    n = jnp.tanh(op @ p['wxn'] + p['b_in'] + r * (h0 @ p['whn'] + p['b_hn']))
    h1 = (1.0 - z) * n + z * h0
    hp = softmax(h1 @ p['whp'] + p['bhp'])
    d = jax.nn.relu(x @ p['wd1x'] + hp @ p['wd1h'] + p['bd1'])
    d = jax.nn.relu(d @ p['wd2'] + p['bd2'])
    a = jnp.tanh(d @ p['wa1'] + p['ba1'])
    a = jnp.tanh(a @ p['wa2'] + p['ba2'])
    c = jnp.tanh(d @ p['wc1'] + p['bc1'])
    c = jnp.tanh(c @ p['wc2'] + p['bc2'])
    v = c @ p['wcl'] + p['bcl']
    return v, a, h1, op, hp, h1


if __name__ == "__main__":
    key = jax.random.PRNGKey(0)
    kp, kx, kh, km, kxs, kms = jax.random.split(key, 6)
    params = make_params(kp)
    w_head, w_slab, b_slab = pack_params(params)

    H = OUTPUT_SIZE
    inputs = jax.random.normal(kx, (BATCH, NUM_INPUTS), jnp.float32)
    hidden = jax.random.normal(kh, (BATCH, H), jnp.float32)
    masks = (jax.random.uniform(km, (BATCH, 1)) > 0.2).astype(jnp.float32)

    # ---------------- single-step forward ----------------
    outs = mlpmodel_forward(inputs, hidden, masks, w_head, w_slab, b_slab)
    outs = jax.block_until_ready(outs)
    values, feature_actor, hidden_out, op, hp, hidden_action = outs
    assert values.shape == (BATCH, 1)
    assert feature_actor.shape == (BATCH, H)
    assert hidden_out.shape == (BATCH, H)
    assert op.shape == (BATCH, O_CLUST)
    assert hp.shape == (BATCH, H_CLUST)
    assert hidden_action.shape == (BATCH, H)

    names = ["values", "feature_actor", "hidden", "op", "hp", "hidden_action"]
    refs = mlpmodel_reference(inputs, hidden, masks, params)
    for name, got, want in zip(names, outs, refs):
        err = float(jnp.max(jnp.abs(got - want)))
        assert err < 5e-2, (name, err)   # default-precision MXU passes; loose tolerance

    # ---------------- T-step rollout (weights resident, hidden in VMEM) ----------------
    T = 8
    inputs_seq = jax.random.normal(kxs, (T, BATCH, NUM_INPUTS), jnp.float32)
    masks_seq = (jax.random.uniform(kms, (T, BATCH, 1)) > 0.2).astype(jnp.float32)
    r_outs = mlpmodel_rollout(inputs_seq, hidden, masks_seq, w_head, w_slab, b_slab)
    r_outs = jax.block_until_ready(r_outs)
    assert r_outs[0].shape == (T, BATCH, 1)
    assert r_outs[2].shape == (T, BATCH, H)

    # reference: step the pure-JAX model T times, carrying the hidden state
    h_ref = hidden
    ref_steps = []
    for t in range(T):
        vt, at_, ht, opt, hpt, _ = mlpmodel_reference(inputs_seq[t], h_ref, masks_seq[t], params)
        ref_steps.append((vt, at_, ht, opt, hpt))
        h_ref = ht
    ref_stacked = [jnp.stack([s[i] for s in ref_steps], axis=0) for i in range(5)]
    for name, got, want in zip(names[:5], r_outs[:5], ref_stacked):
        err = float(jnp.max(jnp.abs(got - want)))
        # tolerance widened slightly: default-precision MXU rounding accumulates over T steps
        assert err < 1e-1, ("rollout_" + name, err)

    print("KERNEL_OK")
</pallas_src>

<mosaic_0001>
module attributes {stable_mosaic.version = 11 : i64} {
  func.func @step_kernel(%arg0: memref<8x128xf32, #tpu.memory_space<vmem>>, %arg1: memref<128x256xf32, #tpu.memory_space<vmem>>, %arg2: memref<240x128xf32, #tpu.memory_space<vmem>>, %arg3: memref<96x128xf32, #tpu.memory_space<vmem>>, %arg4: memref<8x128xf32, #tpu.memory_space<vmem>>) attributes {dimension_semantics = [], scalar_prefetch = 0 : i64, scratch_operands = 0 : i64, tpu.core_type = #tpu.core_type<tc>} {
    %c0 = arith.constant 0 : index
    %c0_0 = arith.constant 0 : index
    %0 = vector.load %arg0[%c0, %c0_0] : memref<8x128xf32, #tpu.memory_space<vmem>>, vector<8x128xf32>
    %1 = vector.extract_strided_slice %0 {offsets = [0, 32], sizes = [8, 32], strides = [1, 1]} : vector<8x128xf32> to vector<8x32xf32>
    %2 = vector.extract_strided_slice %0 {offsets = [0, 64], sizes = [8, 32], strides = [1, 1]} : vector<8x128xf32> to vector<8x32xf32>
    %3 = arith.mulf %1, %2 : vector<8x32xf32>
    %c0_1 = arith.constant 0 : index
    %c0_2 = arith.constant 0 : index
    %4 = vector.load %arg1[%c0_1, %c0_2] : memref<128x256xf32, #tpu.memory_space<vmem>>, vector<128x256xf32>
    %cst = arith.constant dense<0.000000e+00> : vector<8x256xf32>
    %5 = tpu.matmul %0, %4, %cst {dimension_numbers = #tpu.dot_dimension_numbers<[1], [0], [0], [1], [0, 0, 1, 1], [], []>} : vector<8x128xf32>, vector<128x256xf32>, vector<8x256xf32> -> vector<8x256xf32>
    %6 = vector.extract_strided_slice %5 {offsets = [0, 32], sizes = [8, 32], strides = [1, 1]} : vector<8x256xf32> to vector<8x32xf32>
    %7 = vector.extract_strided_slice %5 {offsets = [0, 0], sizes = [8, 32], strides = [1, 1]} : vector<8x256xf32> to vector<8x32xf32>
    %c0_3 = arith.constant 0 : index
    %c0_4 = arith.constant 0 : index
    %8 = vector.load %arg3[%c0_3, %c0_4] : memref<96x128xf32, #tpu.memory_space<vmem>>, vector<8x32xf32>
    %9 = arith.addf %7, %8 : vector<8x32xf32>
    %10 = math.tanh %9 : vector<8x32xf32>
    %c0_5 = arith.constant 0 : index
    %c0_6 = arith.constant 0 : index
    %11 = vector.load %arg2[%c0_5, %c0_6] : memref<240x128xf32, #tpu.memory_space<vmem>>, vector<32x32xf32>
    %cst_7 = arith.constant dense<0.000000e+00> : vector<8x32xf32>
    %12 = tpu.matmul %10, %11, %cst_7 {dimension_numbers = #tpu.dot_dimension_numbers<[1], [0], [0], [1], [0, 0, 1, 1], [], []>} : vector<8x32xf32>, vector<32x32xf32>, vector<8x32xf32> -> vector<8x32xf32>
    %c8 = arith.constant 8 : index
    %c0_8 = arith.constant 0 : index
    %13 = vector.load %arg3[%c8, %c0_8] : memref<96x128xf32, #tpu.memory_space<vmem>>, vector<8x32xf32>
    %14 = arith.addf %12, %13 : vector<8x32xf32>
    %15 = math.tanh %14 : vector<8x32xf32>
    %c32 = arith.constant 32 : index
    %c0_9 = arith.constant 0 : index
    %16 = vector.load %arg2[%c32, %c0_9] : memref<240x128xf32, #tpu.memory_space<vmem>>, vector<32x8xf32>
    %cst_10 = arith.constant dense<0.000000e+00> : vector<8x8xf32>
    %17 = tpu.matmul %15, %16, %cst_10 {dimension_numbers = #tpu.dot_dimension_numbers<[1], [0], [0], [1], [0, 0, 1, 1], [], []>} : vector<8x32xf32>, vector<32x8xf32>, vector<8x8xf32> -> vector<8x8xf32>
    %c16 = arith.constant 16 : index
    %c0_11 = arith.constant 0 : index
    %18 = vector.load %arg3[%c16, %c0_11] : memref<96x128xf32, #tpu.memory_space<vmem>>, vector<8x8xf32>
    %19 = arith.addf %17, %18 : vector<8x8xf32>
    %cst_12 = arith.constant dense<0xFF800000> : vector<8xf32>
    %20 = vector.multi_reduction <maximumf>, %19, %cst_12 [1] : vector<8x8xf32> to vector<8xf32>
    %21 = vector.shape_cast %20 : vector<8xf32> to vector<8x1xf32>
    %22 = vector.broadcast %21 : vector<8x1xf32> to vector<8x8xf32>
    %23 = arith.subf %19, %22 : vector<8x8xf32>
    %24 = math.exp %23 : vector<8x8xf32>
    %cst_13 = arith.constant dense<0.000000e+00> : vector<8xf32>
    %25 = vector.multi_reduction <add>, %24, %cst_13 [1] : vector<8x8xf32> to vector<8xf32>
    %26 = vector.shape_cast %25 : vector<8xf32> to vector<8x1xf32>
    %27 = tpu.reciprocal %26 {approx = true} : vector<8x1xf32> -> vector<8x1xf32>
    %28 = arith.mulf %26, %27 : vector<8x1xf32>
    %cst_14 = arith.constant 2.000000e+00 : f32
    %29 = vector.broadcast %cst_14 : f32 to vector<8x1xf32>
    %30 = arith.subf %29, %28 : vector<8x1xf32>
    %31 = arith.mulf %27, %30 : vector<8x1xf32>
    %32 = vector.broadcast %31 : vector<8x1xf32> to vector<8x8xf32>
    %33 = arith.mulf %24, %32 : vector<8x8xf32>
    %c64 = arith.constant 64 : index
    %c0_15 = arith.constant 0 : index
    %34 = vector.load %arg2[%c64, %c0_15] : memref<240x128xf32, #tpu.memory_space<vmem>>, vector<8x128xf32>
    %cst_16 = arith.constant dense<0.000000e+00> : vector<8x128xf32>
    %35 = tpu.matmul %33, %34, %cst_16 {dimension_numbers = #tpu.dot_dimension_numbers<[1], [0], [0], [1], [0, 0, 1, 1], [], []>} : vector<8x8xf32>, vector<8x128xf32>, vector<8x128xf32> -> vector<8x128xf32>
    %c24 = arith.constant 24 : index
    %c0_17 = arith.constant 0 : index
    %36 = vector.load %arg3[%c24, %c0_17] : memref<96x128xf32, #tpu.memory_space<vmem>>, vector<8x128xf32>
    %37 = arith.addf %35, %36 : vector<8x128xf32>
    %38 = vector.extract_strided_slice %5 {offsets = [0, 128], sizes = [8, 32], strides = [1, 1]} : vector<8x256xf32> to vector<8x32xf32>
    %39 = arith.mulf %2, %38 : vector<8x32xf32>
    %c32_18 = arith.constant 32 : index
    %c0_19 = arith.constant 0 : index
    %40 = vector.load %arg3[%c32_18, %c0_19] : memref<96x128xf32, #tpu.memory_space<vmem>>, vector<8x32xf32>
    %41 = arith.addf %39, %40 : vector<8x32xf32>
    %42 = vector.extract_strided_slice %5 {offsets = [0, 160], sizes = [8, 32], strides = [1, 1]} : vector<8x256xf32> to vector<8x32xf32>
    %43 = arith.mulf %2, %42 : vector<8x32xf32>
    %c32_20 = arith.constant 32 : index
    %c32_21 = arith.constant 32 : index
    %44 = vector.load %arg3[%c32_20, %c32_21] : memref<96x128xf32, #tpu.memory_space<vmem>>, vector<8x32xf32>
    %45 = arith.addf %43, %44 : vector<8x32xf32>
    %46 = vector.extract_strided_slice %5 {offsets = [0, 192], sizes = [8, 32], strides = [1, 1]} : vector<8x256xf32> to vector<8x32xf32>
    %47 = arith.mulf %2, %46 : vector<8x32xf32>
    %c32_22 = arith.constant 32 : index
    %c64_23 = arith.constant 64 : index
    %48 = vector.load %arg3[%c32_22, %c64_23] : memref<96x128xf32, #tpu.memory_space<vmem>>, vector<8x32xf32>
    %49 = arith.addf %47, %48 : vector<8x32xf32>
    %50 = vector.extract_strided_slice %37 {offsets = [0, 0], sizes = [8, 32], strides = [1, 1]} : vector<8x128xf32> to vector<8x32xf32>
    %51 = arith.addf %50, %41 : vector<8x32xf32>
    %cst_24 = arith.constant 5.000000e-01 : f32
    %52 = vector.broadcast %cst_24 : f32 to vector<8x32xf32>
    %53 = arith.mulf %52, %51 : vector<8x32xf32>
    %54 = math.tanh %53 : vector<8x32xf32>
    %cst_25 = arith.constant 5.000000e-01 : f32
    %55 = vector.broadcast %cst_25 : f32 to vector<8x32xf32>
    %56 = arith.mulf %55, %54 : vector<8x32xf32>
    %cst_26 = arith.constant 5.000000e-01 : f32
    %57 = vector.broadcast %cst_26 : f32 to vector<8x32xf32>
    %58 = arith.addf %56, %57 : vector<8x32xf32>
    %59 = vector.extract_strided_slice %37 {offsets = [0, 32], sizes = [8, 32], strides = [1, 1]} : vector<8x128xf32> to vector<8x32xf32>
    %60 = arith.addf %59, %45 : vector<8x32xf32>
    %cst_27 = arith.constant 5.000000e-01 : f32
    %61 = vector.broadcast %cst_27 : f32 to vector<8x32xf32>
    %62 = arith.mulf %61, %60 : vector<8x32xf32>
    %63 = math.tanh %62 : vector<8x32xf32>
    %cst_28 = arith.constant 5.000000e-01 : f32
    %64 = vector.broadcast %cst_28 : f32 to vector<8x32xf32>
    %65 = arith.mulf %64, %63 : vector<8x32xf32>
    %cst_29 = arith.constant 5.000000e-01 : f32
    %66 = vector.broadcast %cst_29 : f32 to vector<8x32xf32>
    %67 = arith.addf %65, %66 : vector<8x32xf32>
    %68 = vector.extract_strided_slice %37 {offsets = [0, 64], sizes = [8, 32], strides = [1, 1]} : vector<8x128xf32> to vector<8x32xf32>
    %69 = arith.mulf %58, %49 : vector<8x32xf32>
    %70 = arith.addf %68, %69 : vector<8x32xf32>
    %71 = math.tanh %70 : vector<8x32xf32>
    %cst_30 = arith.constant 1.000000e+00 : f32
    %72 = vector.broadcast %cst_30 : f32 to vector<8x32xf32>
    %73 = arith.subf %72, %67 : vector<8x32xf32>
    %74 = arith.mulf %73, %71 : vector<8x32xf32>
    %75 = arith.mulf %67, %3 : vector<8x32xf32>
    %76 = arith.addf %74, %75 : vector<8x32xf32>
    %c72 = arith.constant 72 : index
    %c0_31 = arith.constant 0 : index
    %77 = vector.load %arg2[%c72, %c0_31] : memref<240x128xf32, #tpu.memory_space<vmem>>, vector<32x5xf32>
    %cst_32 = arith.constant dense<0.000000e+00> : vector<8x5xf32>
    %78 = tpu.matmul %76, %77, %cst_32 {dimension_numbers = #tpu.dot_dimension_numbers<[1], [0], [0], [1], [0, 0, 1, 1], [], []>} : vector<8x32xf32>, vector<32x5xf32>, vector<8x5xf32> -> vector<8x5xf32>
    %c40 = arith.constant 40 : index
    %c0_33 = arith.constant 0 : index
    %79 = vector.load %arg3[%c40, %c0_33] : memref<96x128xf32, #tpu.memory_space<vmem>>, vector<8x5xf32>
    %80 = arith.addf %78, %79 : vector<8x5xf32>
    %cst_34 = arith.constant dense<0xFF800000> : vector<8xf32>
    %81 = vector.multi_reduction <maximumf>, %80, %cst_34 [1] : vector<8x5xf32> to vector<8xf32>
    %82 = vector.shape_cast %81 : vector<8xf32> to vector<8x1xf32>
    %83 = vector.broadcast %82 : vector<8x1xf32> to vector<8x5xf32>
    %84 = arith.subf %80, %83 : vector<8x5xf32>
    %85 = math.exp %84 : vector<8x5xf32>
    %cst_35 = arith.constant dense<0.000000e+00> : vector<8xf32>
    %86 = vector.multi_reduction <add>, %85, %cst_35 [1] : vector<8x5xf32> to vector<8xf32>
    %87 = vector.shape_cast %86 : vector<8xf32> to vector<8x1xf32>
    %88 = tpu.reciprocal %87 {approx = true} : vector<8x1xf32> -> vector<8x1xf32>
    %89 = arith.mulf %87, %88 : vector<8x1xf32>
    %cst_36 = arith.constant 2.000000e+00 : f32
    %90 = vector.broadcast %cst_36 : f32 to vector<8x1xf32>
    %91 = arith.subf %90, %89 : vector<8x1xf32>
    %92 = arith.mulf %88, %91 : vector<8x1xf32>
    %93 = vector.broadcast %92 : vector<8x1xf32> to vector<8x5xf32>
    %94 = arith.mulf %85, %93 : vector<8x5xf32>
    %c104 = arith.constant 104 : index
    %c0_37 = arith.constant 0 : index
    %95 = vector.load %arg2[%c104, %c0_37] : memref<240x128xf32, #tpu.memory_space<vmem>>, vector<5x32xf32>
    %cst_38 = arith.constant dense<0.000000e+00> : vector<8x32xf32>
    %96 = tpu.matmul %94, %95, %cst_38 {dimension_numbers = #tpu.dot_dimension_numbers<[1], [0], [0], [1], [0, 0, 1, 1], [], []>} : vector<8x5xf32>, vector<5x32xf32>, vector<8x32xf32> -> vector<8x32xf32>
    %97 = arith.addf %6, %96 : vector<8x32xf32>
    %c48 = arith.constant 48 : index
    %c0_39 = arith.constant 0 : index
    %98 = vector.load %arg3[%c48, %c0_39] : memref<96x128xf32, #tpu.memory_space<vmem>>, vector<8x32xf32>
    %99 = arith.addf %97, %98 : vector<8x32xf32>
    %cst_40 = arith.constant 0.000000e+00 : f32
    %100 = vector.broadcast %cst_40 : f32 to vector<8x32xf32>
    %101 = arith.maximumf %99, %100 : vector<8x32xf32>
    %c112 = arith.constant 112 : index
    %c0_41 = arith.constant 0 : index
    %102 = vector.load %arg2[%c112, %c0_41] : memref<240x128xf32, #tpu.memory_space<vmem>>, vector<32x32xf32>
    %cst_42 = arith.constant dense<0.000000e+00> : vector<8x32xf32>
    %103 = tpu.matmul %101, %102, %cst_42 {dimension_numbers = #tpu.dot_dimension_numbers<[1], [0], [0], [1], [0, 0, 1, 1], [], []>} : vector<8x32xf32>, vector<32x32xf32>, vector<8x32xf32> -> vector<8x32xf32>
    %c56 = arith.constant 56 : index
    %c0_43 = arith.constant 0 : index
    %104 = vector.load %arg3[%c56, %c0_43] : memref<96x128xf32, #tpu.memory_space<vmem>>, vector<8x32xf32>
    %105 = arith.addf %103, %104 : vector<8x32xf32>
    %cst_44 = arith.constant 0.000000e+00 : f32
    %106 = vector.broadcast %cst_44 : f32 to vector<8x32xf32>
    %107 = arith.maximumf %105, %106 : vector<8x32xf32>
    %c144 = arith.constant 144 : index
    %c0_45 = arith.constant 0 : index
    %108 = vector.load %arg2[%c144, %c0_45] : memref<240x128xf32, #tpu.memory_space<vmem>>, vector<32x64xf32>
    %cst_46 = arith.constant dense<0.000000e+00> : vector<8x64xf32>
    %109 = tpu.matmul %107, %108, %cst_46 {dimension_numbers = #tpu.dot_dimension_numbers<[1], [0], [0], [1], [0, 0, 1, 1], [], []>} : vector<8x32xf32>, vector<32x64xf32>, vector<8x64xf32> -> vector<8x64xf32>
    %c64_47 = arith.constant 64 : index
    %c0_48 = arith.constant 0 : index
    %110 = vector.load %arg3[%c64_47, %c0_48] : memref<96x128xf32, #tpu.memory_space<vmem>>, vector<8x64xf32>
    %111 = arith.addf %109, %110 : vector<8x64xf32>
    %112 = math.tanh %111 : vector<8x64xf32>
    %c176 = arith.constant 176 : index
    %c0_49 = arith.constant 0 : index
    %113 = vector.load %arg2[%c176, %c0_49] : memref<240x128xf32, #tpu.memory_space<vmem>>, vector<64x128xf32>
    %cst_50 = arith.constant dense<0.000000e+00> : vector<8x128xf32>
    %114 = tpu.matmul %112, %113, %cst_50 {dimension_numbers = #tpu.dot_dimension_numbers<[1], [0], [0], [1], [0, 0, 1, 1], [], []>} : vector<8x64xf32>, vector<64x128xf32>, vector<8x128xf32> -> vector<8x128xf32>
    %c72_51 = arith.constant 72 : index
    %c0_52 = arith.constant 0 : index
    %115 = vector.load %arg3[%c72_51, %c0_52] : memref<96x128xf32, #tpu.memory_space<vmem>>, vector<8x128xf32>
    %116 = arith.addf %114, %115 : vector<8x128xf32>
    %117 = math.tanh %116 : vector<8x128xf32>
    %118 = vector.extract_strided_slice %117 {offsets = [0, 0], sizes = [8, 32], strides = [1, 1]} : vector<8x128xf32> to vector<8x32xf32>
    %119 = vector.extract_strided_slice %117 {offsets = [0, 32], sizes = [8, 32], strides = [1, 1]} : vector<8x128xf32> to vector<8x32xf32>
    %c80 = arith.constant 80 : index
    %c0_53 = arith.constant 0 : index
    %120 = vector.load %arg3[%c80, %c0_53] : memref<96x128xf32, #tpu.memory_space<vmem>>, vector<8x32xf32>
    %121 = arith.mulf %119, %120 : vector<8x32xf32>
    %cst_54 = arith.constant dense<0.000000e+00> : vector<8xf32>
    %122 = vector.multi_reduction <add>, %121, %cst_54 [1] : vector<8x32xf32> to vector<8xf32>
    %123 = vector.shape_cast %122 : vector<8xf32> to vector<8x1xf32>
    %c88 = arith.constant 88 : index
    %c0_55 = arith.constant 0 : index
    %124 = vector.load %arg3[%c88, %c0_55] : memref<96x128xf32, #tpu.memory_space<vmem>>, vector<8x1xf32>
    %125 = arith.addf %123, %124 : vector<8x1xf32>
    %cst_56 = arith.constant 0.000000e+00 : f32
    %126 = vector.broadcast %cst_56 : f32 to vector<8x50xf32>
    %127 = tpu.concatenate %118, %76, %33, %94, %125, %126 in 1 : vector<8x32xf32>, vector<8x32xf32>, vector<8x8xf32>, vector<8x5xf32>, vector<8x1xf32>, vector<8x50xf32> -> vector<8x128xf32>
    %c0_57 = arith.constant 0 : index
    %c0_58 = arith.constant 0 : index
    %128 = vector.load %arg4[%c0_57, %c0_58] : memref<8x128xf32, #tpu.memory_space<vmem>>, vector<8x128xf32>
    tpu.vector_store %arg4[%c0_57, %c0_58], %127 {strides = array<i32>} : memref<8x128xf32, #tpu.memory_space<vmem>>, vector<8x128xf32>,
    return
  }
}

</mosaic_0001>

<llo_original>
// kernel: tpu_custom_call.1
$region0: #{tpu_custom_call.1}
  #allocation0 [shape = 'u32[]', space=smem, size = 0x4, offset = 0x4, fixed_abs, tag = 'smem constant byte address 0x4 - core index']
  #allocation1 [shape = 'u32[144,128]{1,0:T(1,128)}', space=vmem, size = 0x12000, scoped, tag = 'internal scratch']
  %s0 = inlined_call_operand.hbm [shape: f32[8,128], index: 0, kind: input, shape index: {}]
  %s1 = inlined_call_operand.hbm [shape: f32[128,256], index: 1, kind: input, shape index: {}]
  %s2 = inlined_call_operand.hbm [shape: f32[240,128], index: 2, kind: input, shape index: {}]
  %s3 = inlined_call_operand.hbm [shape: f32[96,128], index: 3, kind: input, shape index: {}]
  %s4 = inlined_call_operand.hbm [shape: f32[8,128], index: 4, kind: output, shape index: {}]
  %s5 = sld [smem:[#allocation0]]
  $region42: #{tpu_custom_call.1} parent=0
    _
  %s7 = ssub.s32 1, %s5
  %s8 = scalar_select 0, %s7, %s5
  $region1: #{tpu_custom_call.1} parent=0
    #allocation2 [shape = 'u8[4096]{0}', space=vmem, size = 0x1000, scoped, tag = 'input window, operand 0, single buffered']
    #allocation3 [shape = 's32[1]{0}', space=sflag, size = 0x4, scoped, tag = 'scoped memory for tpu_custom_call.1']
    #allocation4 [shape = 's32[1]{0}', space=sflag, size = 0x4, scoped, tag = 'scoped memory for tpu_custom_call.1']
    #allocation5 [shape = 'u8[131072]{0}', space=vmem, size = 0x20000, scoped, tag = 'input window, operand 1, single buffered']
    #allocation6 [shape = 's32[1]{0}', space=sflag, size = 0x4, scoped, tag = 'scoped memory for tpu_custom_call.1']
    #allocation7 [shape = 'u8[122880]{0}', space=vmem, size = 0x1e000, scoped, tag = 'input window, operand 2, single buffered']
    #allocation8 [shape = 'u8[49152]{0}', space=vmem, size = 0xc000, scoped, tag = 'input window, operand 3, single buffered']
    #allocation9 [shape = 's32[1]{0}', space=sflag, size = 0x4, scoped, tag = 'scoped memory for tpu_custom_call.1']
    #allocation10 [shape = 'u8[4096]{0}', space=vmem, size = 0x1000, scoped, tag = 'output window, operand 0, single buffered']
    %9 = vsyncpa [#allocation3], 0
    %10 = vsyncpa [#allocation6], 0
    %11 = vsyncpa [#allocation9], 0
    %12 = vsyncpa [#allocation4], 0
    // Predicated region
    $region2: #{tpu_custom_call.1} parent=1 // pred_check
      _
    $region3: #{tpu_custom_call.1} parent=1 // pred_check_branch
      %14 = sbr.rel (0) target = $region5
    $region4: #{tpu_custom_call.1} parent=1 // pred_region
      %s16 = ssub.s32 128, 128
      %17 = vsyncadd [#allocation3], %s16
      %s19 = sshll.u32 [#allocation2], 4
      %s20 = int_to_ptr.vmem [resolvable:$true] %s19
      %22 = dma.hbm_to_vmem [thread:$0]  %s0, 128, %s20, [#allocation3]
    $region5: #{tpu_custom_call.1} parent=1 // pred_fallthru
      _
    // Predicated region
    $region6: #{tpu_custom_call.1} parent=1 // pred_check
      _
    $region7: #{tpu_custom_call.1} parent=1 // pred_check_branch
      %24 = sbr.rel (0) target = $region9
    $region8: #{tpu_custom_call.1} parent=1 // pred_region
      %s26 = ssub.s32 4096, 4096
      %27 = vsyncadd [#allocation6], %s26
      %s28 = sshll.u32 [#allocation5], 4
      %s29 = int_to_ptr.vmem [resolvable:$true] %s28
      %34 = dma.hbm_to_vmem [thread:$0]  %s1, 4096, %s29, [#allocation6], 256, 256, 16
    $region9: #{tpu_custom_call.1} parent=1 // pred_fallthru
      _
    // Predicated region
    $region10: #{tpu_custom_call.1} parent=1 // pred_check
      _
    $region11: #{tpu_custom_call.1} parent=1 // pred_check_branch
      %36 = sbr.rel (0) target = $region13
    $region12: #{tpu_custom_call.1} parent=1 // pred_region
      %s38 = ssub.s32 3840, 3840
      %39 = vsyncadd [#allocation6], %s38
      %s40 = sshll.u32 [#allocation7], 4
      %s41 = int_to_ptr.vmem [resolvable:$true] %s40
      %46 = dma.hbm_to_vmem [thread:$0]  %s2, 3840, %s41, [#allocation6], 128, 128, 8
    $region13: #{tpu_custom_call.1} parent=1 // pred_fallthru
      _
    // Predicated region
    $region14: #{tpu_custom_call.1} parent=1 // pred_check
      _
    $region15: #{tpu_custom_call.1} parent=1 // pred_check_branch
      %48 = sbr.rel (0) target = $region17
    $region16: #{tpu_custom_call.1} parent=1 // pred_region
      %s50 = ssub.s32 1536, 1536
      %51 = vsyncadd [#allocation9], %s50
      %s52 = sshll.u32 [#allocation8], 4
      %s53 = int_to_ptr.vmem [resolvable:$true] %s52
      %58 = dma.hbm_to_vmem [thread:$0]  %s3, 1536, %s53, [#allocation9], 128, 128, 8
    $region17: #{tpu_custom_call.1} parent=1 // pred_fallthru
      _
    // Predicated region
    $region18: #{tpu_custom_call.1} parent=1 // pred_check
      _
    $region19: #{tpu_custom_call.1} parent=1 // pred_check_branch
      %60 = sbr.rel (0) target = $region21
    $region20: #{tpu_custom_call.1} parent=1 // pred_region
      %61 = dma.done [#allocation3], 128
    $region21: #{tpu_custom_call.1} parent=1 // pred_fallthru
      _
    // Predicated region
    $region22: #{tpu_custom_call.1} parent=1 // pred_check
      _
    $region23: #{tpu_custom_call.1} parent=1 // pred_check_branch
      %63 = sbr.rel (0) target = $region25
    $region24: #{tpu_custom_call.1} parent=1 // pred_region
      %64 = dma.done [#allocation6], 4096
    $region25: #{tpu_custom_call.1} parent=1 // pred_fallthru
      _
    // Predicated region
    $region26: #{tpu_custom_call.1} parent=1 // pred_check
      _
    $region27: #{tpu_custom_call.1} parent=1 // pred_check_branch
      %66 = sbr.rel (0) target = $region29
    $region28: #{tpu_custom_call.1} parent=1 // pred_region
      %67 = dma.done [#allocation6], 3840
    $region29: #{tpu_custom_call.1} parent=1 // pred_fallthru
      _
    // Predicated region
    $region30: #{tpu_custom_call.1} parent=1 // pred_check
      _
    $region31: #{tpu_custom_call.1} parent=1 // pred_check_branch
      %69 = sbr.rel (0) target = $region33
    $region32: #{tpu_custom_call.1} parent=1 // pred_region
      %70 = dma.done [#allocation9], 1536
    $region33: #{tpu_custom_call.1} parent=1 // pred_fallthru
      _
    %v71 = vld [vmem:[#allocation2] sm:$0xff]
    %73 = vrot.lane.b32.xlu0 %v71, 96
    %v74 = vpop.permute.xlu0 %73
    %v76 = vmul.f32 %v71, %v74
    %v77 = vld [vmem:[#allocation5] sm:$0xff]
    %v78 = vld [vmem:[#allocation5 + $0x8] sm:$0xff]
    %v79 = vld [vmem:[#allocation5 + $0x10] sm:$0xff]
    %v80 = vld [vmem:[#allocation5 + $0x18] sm:$0xff]
    %v81 = vld [vmem:[#allocation5 + $0x20] sm:$0xff]
    %v82 = vld [vmem:[#allocation5 + $0x28] sm:$0xff]
    %v83 = vld [vmem:[#allocation5 + $0x30] sm:$0xff]
    %v84 = vld [vmem:[#allocation5 + $0x38] sm:$0xff]
    %v85 = vld [vmem:[#allocation5 + $0x40] sm:$0xff]
    %v86 = vld [vmem:[#allocation5 + $0x48] sm:$0xff]
    %v87 = vld [vmem:[#allocation5 + $0x50] sm:$0xff]
    %v88 = vld [vmem:[#allocation5 + $0x58] sm:$0xff]
    %v89 = vld [vmem:[#allocation5 + $0x60] sm:$0xff]
    %v90 = vld [vmem:[#allocation5 + $0x68] sm:$0xff]
    %v91 = vld [vmem:[#allocation5 + $0x70] sm:$0xff]
    %v92 = vld [vmem:[#allocation5 + $0x78] sm:$0xff]
    %v93 = vld [vmem:[#allocation5 + $0x80] sm:$0xff]
    %v94 = vld [vmem:[#allocation5 + $0x88] sm:$0xff]
    %v95 = vld [vmem:[#allocation5 + $0x90] sm:$0xff]
    %v96 = vld [vmem:[#allocation5 + $0x98] sm:$0xff]
    %v97 = vld [vmem:[#allocation5 + $0xa0] sm:$0xff]
    %v98 = vld [vmem:[#allocation5 + $0xa8] sm:$0xff]
    %v99 = vld [vmem:[#allocation5 + $0xb0] sm:$0xff]
    %v100 = vld [vmem:[#allocation5 + $0xb8] sm:$0xff]
    %v101 = vld [vmem:[#allocation5 + $0xc0] sm:$0xff]
    %v102 = vld [vmem:[#allocation5 + $0xc8] sm:$0xff]
    %v103 = vld [vmem:[#allocation5 + $0xd0] sm:$0xff]
    %v104 = vld [vmem:[#allocation5 + $0xd8] sm:$0xff]
    %v105 = vld [vmem:[#allocation5 + $0xe0] sm:$0xff]
    %v106 = vld [vmem:[#allocation5 + $0xe8] sm:$0xff]
    %v107 = vld [vmem:[#allocation5 + $0xf0] sm:$0xff]
    %v108 = vld [vmem:[#allocation5 + $0xf8] sm:$0xff]
    %109 = vmatprep.subr.mxu0 %v78
    %110 = vmatpush1.msra.mxu0 %v77
    %111 = vmatprep.subr.mxu0 %v80
    %112 = vmatpush1.msra.mxu0 %v79
    %113 = vmatprep.subr.mxu0 %v82
    %114 = vmatpush1.msra.mxu0 %v81
    %115 = vmatprep.subr.mxu0 %v84
    %116 = vmatpush1.msra.mxu0 %v83
    %117 = vmatprep.subr.mxu0 %v86
    %118 = vmatpush1.msra.mxu0 %v85
    %119 = vmatprep.subr.mxu0 %v88
    %120 = vmatpush1.msra.mxu0 %v87
    %121 = vmatprep.subr.mxu0 %v90
    %122 = vmatpush1.msra.mxu0 %v89
    %123 = vmatprep.subr.mxu0 %v92
    %124 = vmatpush1.msra.mxu0 %v91
    %125 = vmatprep.subr.mxu0 %v94
    %126 = vmatpush1.msra.mxu0 %v93
    %127 = vmatprep.subr.mxu0 %v96
    %128 = vmatpush1.msra.mxu0 %v95
    %129 = vmatprep.subr.mxu0 %v98
    %130 = vmatpush1.msra.mxu0 %v97
    %131 = vmatprep.subr.mxu0 %v100
    %132 = vmatpush1.msra.mxu0 %v99
    %133 = vmatprep.subr.mxu0 %v102
    %134 = vmatpush1.msra.mxu0 %v101
    %135 = vmatprep.subr.mxu0 %v104
    %136 = vmatpush1.msra.mxu0 %v103
    %137 = vmatprep.subr.mxu0 %v106
    %138 = vmatpush1.msra.mxu0 %v105
    %139 = vmatprep.subr.mxu0 %v108
    %140 = vmatpush1.msra.mxu0 %v107
    %141 = vmatprep.subr.mxu0 0.0
    %142 = vmatpush1.msra.mxu0 0.0
    %143 = vmatprep.subr.mxu0 0.0
    %144 = vmatpush1.msra.mxu0 0.0
    %145 = vmatprep.subr.mxu0 0.0
    %146 = vmatpush1.msra.mxu0 0.0
    %147 = vmatprep.subr.mxu0 0.0
    %148 = vmatpush1.msra.mxu0 0.0
    %149 = vmatprep.subr.mxu0 0.0
    %150 = vmatpush1.msra.mxu0 0.0
    %151 = vmatprep.subr.mxu0 0.0
    %152 = vmatpush1.msra.mxu0 0.0
    %153 = vmatprep.subr.mxu0 0.0
    %154 = vmatpush1.msra.mxu0 0.0
    %155 = vmatprep.subr.mxu0 0.0
    %156 = vmatpush1.msra.mxu0 0.0
    %157 = vmatprep.subr.mxu0 0.0
    %158 = vmatpush1.msra.mxu0 0.0
    %159 = vmatprep.subr.mxu0 0.0
    %160 = vmatpush1.msra.mxu0 0.0
    %161 = vmatprep.subr.mxu0 0.0
    %162 = vmatpush1.msra.mxu0 0.0
    %163 = vmatprep.subr.mxu0 0.0
    %164 = vmatpush1.msra.mxu0 0.0
    %165 = vmatprep.subr.mxu0 0.0
    %166 = vmatpush1.msra.mxu0 0.0
    %167 = vmatprep.subr.mxu0 0.0
    %168 = vmatpush1.msra.mxu0 0.0
    %169 = vmatprep.subr.mxu0 0.0
    %170 = vmatpush1.msra.mxu0 0.0
    %171 = vmatprep.subr.mxu0 0.0
    %172 = vmatpush1.msra.mxu0 0.0
    %173 = vmatprep.mubr.f32.mxu0 0.0
    %174 = vmatmul.mubr.f32.gmra.mrb[0].mxu0 %v71
    %v175 = vpop.f32.mrb[0].mxu0
    %v176 = vadd.f32 0.0, %v175
    %v177 = vpop.f32.mrb[0].mxu0
    %v178 = vadd.f32 0.0, %v177
    %179 = vdwg.mxu0
    %v180 = vld [vmem:[#allocation8] sm:$0xff]
    %v181 = vadd.f32 %v176, %v180
    %v182 = vtanh.pop %v181
    %v183 = vld [vmem:[#allocation7] sm:$0xff]
    %v184 = vld [vmem:[#allocation7 + $0x8] sm:$0xff]
    %v185 = vld [vmem:[#allocation7 + $0x10] sm:$0xff]
    %v186 = vld [vmem:[#allocation7 + $0x18] sm:$0xff]
    %v187 = vld [vmem:[#allocation8 + $0x8] sm:$0xff]
    %vm188 = vcmask 261120
    %v190 = vsel %vm188, %v182, 0
    %192 = vmatprep.subr.mxu0 0.0
    %193 = vmatpush1.msra.mxu0 %v183
    %194 = vmatprep.subr.mxu0 0.0
    %195 = vmatpush1.msra.mxu0 %v184
    %196 = vmatprep.subr.mxu0 0.0
    %197 = vmatpush1.msra.mxu0 %v185
    %198 = vmatprep.subr.mxu0 0.0
    %199 = vmatpush1.msra.mxu0 %v186
    %200 = vmatprep.subr.mxu0 0.0
    %201 = vmatpush1.msra.mxu0 0.0
    %202 = vmatprep.subr.mxu0 0.0
    %203 = vmatpush1.msra.mxu0 0.0
    %204 = vmatprep.subr.mxu0 0.0
    %205 = vmatpush1.msra.mxu0 0.0
    %206 = vmatprep.subr.mxu0 0.0
    %207 = vmatpush1.msra.mxu0 0.0
    %208 = vmatprep.subr.mxu0 0.0
    %209 = vmatpush1.msra.mxu0 0.0
    %210 = vmatprep.subr.mxu0 0.0
    %211 = vmatpush1.msra.mxu0 0.0
    %212 = vmatprep.subr.mxu0 0.0
    %213 = vmatpush1.msra.mxu0 0.0
    %214 = vmatprep.subr.mxu0 0.0
    %215 = vmatpush1.msra.mxu0 0.0
    %216 = vmatprep.subr.mxu0 0.0
    %217 = vmatpush1.msra.mxu0 0.0
    %218 = vmatprep.subr.mxu0 0.0
    %219 = vmatpush1.msra.mxu0 0.0
    %220 = vmatprep.subr.mxu0 0.0
    %221 = vmatpush1.msra.mxu0 0.0
    %222 = vmatprep.subr.mxu0 0.0
    %223 = vmatpush1.msra.mxu0 0.0
    %224 = vmatprep.subr.mxu0 0.0
    %225 = vmatpush1.msra.mxu0 0.0
    %226 = vmatprep.subr.mxu0 0.0
    %227 = vmatpush1.msra.mxu0 0.0
    %228 = vmatprep.subr.mxu0 0.0
    %229 = vmatpush1.msra.mxu0 0.0
    %230 = vmatprep.subr.mxu0 0.0
    %231 = vmatpush1.msra.mxu0 0.0
    %232 = vmatprep.subr.mxu0 0.0
    %233 = vmatpush1.msra.mxu0 0.0
    %234 = vmatprep.subr.mxu0 0.0
    %235 = vmatpush1.msra.mxu0 0.0
    %236 = vmatprep.subr.mxu0 0.0
    %237 = vmatpush1.msra.mxu0 0.0
    %238 = vmatprep.subr.mxu0 0.0
    %239 = vmatpush1.msra.mxu0 0.0
    %240 = vmatprep.subr.mxu0 0.0
    %241 = vmatpush1.msra.mxu0 0.0
    %242 = vmatprep.subr.mxu0 0.0
    %243 = vmatpush1.msra.mxu0 0.0
    %244 = vmatprep.subr.mxu0 0.0
    %245 = vmatpush1.msra.mxu0 0.0
    %246 = vmatprep.subr.mxu0 0.0
    %247 = vmatpush1.msra.mxu0 0.0
    %248 = vmatprep.subr.mxu0 0.0
    %249 = vmatpush1.msra.mxu0 0.0
    %250 = vmatprep.subr.mxu0 0.0
    %251 = vmatpush1.msra.mxu0 0.0
    %252 = vmatprep.subr.mxu0 0.0
    %253 = vmatpush1.msra.mxu0 0.0
    %254 = vmatprep.subr.mxu0 0.0
    %255 = vmatpush1.msra.mxu0 0.0
    %256 = vmatprep.mubr.f32.mxu0 0.0
    %257 = vmatmul.mubr.f32.gmra.mrb[0].mxu0 %v190
    %v258 = vpop.f32.mrb[0].mxu0
    %v259 = vadd.f32 %v187, %v258
    %v260 = vpop.f32.mrb[0].mxu0
    %261 = vdwg.mxu0
    %v262 = vtanh.pop %v259
    %v263 = vld [vmem:[#allocation7 + $0x20] sm:$0xff]
    %v264 = vld [vmem:[#allocation7 + $0x28] sm:$0xff]
    %v265 = vld [vmem:[#allocation7 + $0x30] sm:$0xff]
    %v266 = vld [vmem:[#allocation7 + $0x38] sm:$0xff]
    %v267 = vld [vmem:[#allocation8 + $0x10] sm:$0xff]
    %v269 = vsel %vm188, %v262, 0
    %271 = vmatprep.subr.mxu0 0.0
    %272 = vmatpush1.msra.mxu0 %v263
    %273 = vmatprep.subr.mxu0 0.0
    %274 = vmatpush1.msra.mxu0 %v264
    %275 = vmatprep.subr.mxu0 0.0
    %276 = vmatpush1.msra.mxu0 %v265
    %277 = vmatprep.subr.mxu0 0.0
    %278 = vmatpush1.msra.mxu0 %v266
    %279 = vmatprep.subr.mxu0 0.0
    %280 = vmatpush1.msra.mxu0 0.0
    %281 = vmatprep.subr.mxu0 0.0
    %282 = vmatpush1.msra.mxu0 0.0
    %283 = vmatprep.subr.mxu0 0.0
    %284 = vmatpush1.msra.mxu0 0.0
    %285 = vmatprep.subr.mxu0 0.0
    %286 = vmatpush1.msra.mxu0 0.0
    %287 = vmatprep.subr.mxu0 0.0
    %288 = vmatpush1.msra.mxu0 0.0
    %289 = vmatprep.subr.mxu0 0.0
    %290 = vmatpush1.msra.mxu0 0.0
    %291 = vmatprep.subr.mxu0 0.0
    %292 = vmatpush1.msra.mxu0 0.0
    %293 = vmatprep.subr.mxu0 0.0
    %294 = vmatpush1.msra.mxu0 0.0
    %295 = vmatprep.subr.mxu0 0.0
    %296 = vmatpush1.msra.mxu0 0.0
    %297 = vmatprep.subr.mxu0 0.0
    %298 = vmatpush1.msra.mxu0 0.0
    %299 = vmatprep.subr.mxu0 0.0
    %300 = vmatpush1.msra.mxu0 0.0
    %301 = vmatprep.subr.mxu0 0.0
    %302 = vmatpush1.msra.mxu0 0.0
    %303 = vmatprep.subr.mxu0 0.0
    %304 = vmatpush1.msra.mxu0 0.0
    %305 = vmatprep.subr.mxu0 0.0
    %306 = vmatpush1.msra.mxu0 0.0
    %307 = vmatprep.subr.mxu0 0.0
    %308 = vmatpush1.msra.mxu0 0.0
    %309 = vmatprep.subr.mxu0 0.0
    %310 = vmatpush1.msra.mxu0 0.0
    %311 = vmatprep.subr.mxu0 0.0
    %312 = vmatpush1.msra.mxu0 0.0
    %313 = vmatprep.subr.mxu0 0.0
    %314 = vmatpush1.msra.mxu0 0.0
    %315 = vmatprep.subr.mxu0 0.0
    %316 = vmatpush1.msra.mxu0 0.0
    %317 = vmatprep.subr.mxu0 0.0
    %318 = vmatpush1.msra.mxu0 0.0
    %319 = vmatprep.subr.mxu0 0.0
    %320 = vmatpush1.msra.mxu0 0.0
    %321 = vmatprep.subr.mxu0 0.0
    %322 = vmatpush1.msra.mxu0 0.0
    %323 = vmatprep.subr.mxu0 0.0
    %324 = vmatpush1.msra.mxu0 0.0
    %325 = vmatprep.subr.mxu0 0.0
    %326 = vmatpush1.msra.mxu0 0.0
    %327 = vmatprep.subr.mxu0 0.0
    %328 = vmatpush1.msra.mxu0 0.0
    %329 = vmatprep.subr.mxu0 0.0
    %330 = vmatpush1.msra.mxu0 0.0
    %331 = vmatprep.subr.mxu0 0.0
    %332 = vmatpush1.msra.mxu0 0.0
    %333 = vmatprep.subr.mxu0 0.0
    %334 = vmatpush1.msra.mxu0 0.0
    %335 = vmatprep.mubr.f32.mxu0 0.0
    %336 = vmatmul.mubr.f32.gmra.mrb[0].mxu0 %v269
    %v337 = vpop.f32.mrb[0].mxu0
    %v338 = vadd.f32 %v267, %v337
    %v339 = vpop.f32.mrb[0].mxu0
    %340 = vdwg.mxu0
    %vm341 = vcmask 64512
    %v342 = vsel %vm341, %v338, -inf
    %343 = vmax.xlane.f32.xlu0 %v342
    %v344 = vpop.xlane.xlu0 %343
    %v345 = vsub.f32 %v338, %v344
    %v346 = vmul.f32 %v345, 1.442695
    %v347 = vpow.pop %v346
    %v348 = vsel %vm341, %v347, 0.0
    %349 = vadd.xlane.f32.xlu0 %v348
    %v350 = vpop.xlane.xlu0 %349
    %v351 = vrcp.pop %v350
    %v352 = vmul.f32 %v350, %v351
    %v353 = vsub.f32 2.0, %v352
    %v354 = vmul.f32 %v351, %v353
    %v355 = vmul.f32 %v347, %v354
    %v356 = vld [vmem:[#allocation7 + $0x40] sm:$0xff]
    %v357 = vld [vmem:[#allocation8 + $0x18] sm:$0xff]
    %v359 = vsel %vm341, %v355, 0
    %361 = vmatprep.subr.mxu0 0.0
    %362 = vmatpush1.msra.mxu0 %v356
    %363 = vmatprep.subr.mxu0 0.0
    %364 = vmatpush1.msra.mxu0 0.0
    %365 = vmatprep.subr.mxu0 0.0
    %366 = vmatpush1.msra.mxu0 0.0
    %367 = vmatprep.subr.mxu0 0.0
    %368 = vmatpush1.msra.mxu0 0.0
    %369 = vmatprep.subr.mxu0 0.0
    %370 = vmatpush1.msra.mxu0 0.0
    %371 = vmatprep.subr.mxu0 0.0
    %372 = vmatpush1.msra.mxu0 0.0
    %373 = vmatprep.subr.mxu0 0.0
    %374 = vmatpush1.msra.mxu0 0.0
    %375 = vmatprep.subr.mxu0 0.0
    %376 = vmatpush1.msra.mxu0 0.0
    %377 = vmatprep.subr.mxu0 0.0
    %378 = vmatpush1.msra.mxu0 0.0
    %379 = vmatprep.subr.mxu0 0.0
    %380 = vmatpush1.msra.mxu0 0.0
    %381 = vmatprep.subr.mxu0 0.0
    %382 = vmatpush1.msra.mxu0 0.0
    %383 = vmatprep.subr.mxu0 0.0
    %384 = vmatpush1.msra.mxu0 0.0
    %385 = vmatprep.subr.mxu0 0.0
    %386 = vmatpush1.msra.mxu0 0.0
    %387 = vmatprep.subr.mxu0 0.0
    %388 = vmatpush1.msra.mxu0 0.0
    %389 = vmatprep.subr.mxu0 0.0
    %390 = vmatpush1.msra.mxu0 0.0
    %391 = vmatprep.subr.mxu0 0.0
    %392 = vmatpush1.msra.mxu0 0.0
    %393 = vmatprep.subr.mxu0 0.0
    %394 = vmatpush1.msra.mxu0 0.0
    %395 = vmatprep.subr.mxu0 0.0
    %396 = vmatpush1.msra.mxu0 0.0
    %397 = vmatprep.subr.mxu0 0.0
    %398 = vmatpush1.msra.mxu0 0.0
    %399 = vmatprep.subr.mxu0 0.0
    %400 = vmatpush1.msra.mxu0 0.0
    %401 = vmatprep.subr.mxu0 0.0
    %402 = vmatpush1.msra.mxu0 0.0
    %403 = vmatprep.subr.mxu0 0.0
    %404 = vmatpush1.msra.mxu0 0.0
    %405 = vmatprep.subr.mxu0 0.0
    %406 = vmatpush1.msra.mxu0 0.0
    %407 = vmatprep.subr.mxu0 0.0
    %408 = vmatpush1.msra.mxu0 0.0
    %409 = vmatprep.subr.mxu0 0.0
    %410 = vmatpush1.msra.mxu0 0.0
    %411 = vmatprep.subr.mxu0 0.0
    %412 = vmatpush1.msra.mxu0 0.0
    %413 = vmatprep.subr.mxu0 0.0
    %414 = vmatpush1.msra.mxu0 0.0
    %415 = vmatprep.subr.mxu0 0.0
    %416 = vmatpush1.msra.mxu0 0.0
    %417 = vmatprep.subr.mxu0 0.0
    %418 = vmatpush1.msra.mxu0 0.0
    %419 = vmatprep.subr.mxu0 0.0
    %420 = vmatpush1.msra.mxu0 0.0
    %421 = vmatprep.subr.mxu0 0.0
    %422 = vmatpush1.msra.mxu0 0.0
    %423 = vmatprep.subr.mxu0 0.0
    %424 = vmatpush1.msra.mxu0 0.0
    %425 = vmatprep.mubr.f32.mxu0 0.0
    %426 = vmatmul.mubr.f32.gmra.mrb[0].mxu0 %v359
    %v427 = vpop.f32.mrb[0].mxu0
    %v428 = vadd.f32 %v357, %v427
    %v429 = vpop.f32.mrb[0].mxu0
    %430 = vdwg.mxu0
    %432 = vrot.lane.b32.xlu0 %v178, 64
    %v433 = vpop.permute.xlu0 %432
    %v435 = vmul.f32 %v71, %v433
    %v436 = vld [vmem:[#allocation8 + $0x20] sm:$0xff]
    %438 = vrot.lane.b32.xlu0 %v436, 64
    %v439 = vpop.permute.xlu0 %438
    %v441 = vadd.f32 %v435, %v439
    %442 = vrot.lane.b32.xlu0 %v178, 32
    %v443 = vpop.permute.xlu0 %442
    %v445 = vmul.f32 %v71, %v443
    %446 = vrot.lane.b32.xlu0 %v436, 32
    %v447 = vpop.permute.xlu0 %446
    %v449 = vadd.f32 %v445, %v447
    %v450 = vmul.f32 %v71, %v178
    %v451 = vadd.f32 %v450, %v436
    %453 = vrot.lane.b32.xlu0 %v441, 64
    %v454 = vpop.permute.xlu0 %453
    %v456 = vadd.f32 %v428, %v454
    %v457 = vmul.f32 %v456, 0.5
    %v458 = vtanh.pop %v457
    %v459 = vmul.f32 %v458, 0.5
    %v460 = vadd.f32 %v459, 0.5
    %462 = vrot.lane.b32.xlu0 %v449, 96
    %v463 = vpop.permute.xlu0 %462
    %v465 = vadd.f32 %v428, %v463
    %v466 = vmul.f32 %v465, 0.5
    %v467 = vtanh.pop %v466
    %v468 = vmul.f32 %v467, 0.5
    %v469 = vadd.f32 %v468, 0.5
    %471 = vrot.lane.b32.xlu0 %v451, 64
    %v472 = vpop.permute.xlu0 %471
    %v474 = vmul.f32 %v460, %v472
    %476 = vrot.lane.b32.xlu0 %v474, 64
    %v477 = vpop.permute.xlu0 %476
    %v479 = vadd.f32 %v428, %v477
    %v480 = vtanh.pop %v479
    %v481 = vsub.f32 1.0, %v469
    %483 = vrot.lane.b32.xlu0 %v480, 96
    %v484 = vpop.permute.xlu0 %483
    %v486 = vmul.f32 %v481, %v484
    %v487 = vmul.f32 %v469, %v76
    %v488 = vadd.f32 %v486, %v487
    %v489 = vld [vmem:[#allocation7 + $0x48] sm:$0xff]
    %v490 = vld [vmem:[#allocation7 + $0x50] sm:$0xff]
    %v491 = vld [vmem:[#allocation7 + $0x58] sm:$0xff]
    %v492 = vld [vmem:[#allocation7 + $0x60] sm:$0xff]
    %v493 = vld [vmem:[#allocation8 + $0x28] sm:$0xff]
    %495 = vrot.lane.b32.xlu0 %v488, 96
    %v496 = vpop.permute.xlu0 %495
    %v497 = vsel %vm188, %v496, 0
    %499 = vmatprep.subr.mxu0 0.0
    %500 = vmatpush1.msra.mxu0 %v489
    %501 = vmatprep.subr.mxu0 0.0
    %502 = vmatpush1.msra.mxu0 %v490
    %503 = vmatprep.subr.mxu0 0.0
    %504 = vmatpush1.msra.mxu0 %v491
    %505 = vmatprep.subr.mxu0 0.0
    %506 = vmatpush1.msra.mxu0 %v492
    %507 = vmatprep.subr.mxu0 0.0
    %508 = vmatpush1.msra.mxu0 0.0
    %509 = vmatprep.subr.mxu0 0.0
    %510 = vmatpush1.msra.mxu0 0.0
    %511 = vmatprep.subr.mxu0 0.0
    %512 = vmatpush1.msra.mxu0 0.0
    %513 = vmatprep.subr.mxu0 0.0
    %514 = vmatpush1.msra.mxu0 0.0
    %515 = vmatprep.subr.mxu0 0.0
    %516 = vmatpush1.msra.mxu0 0.0
    %517 = vmatprep.subr.mxu0 0.0
    %518 = vmatpush1.msra.mxu0 0.0
    %519 = vmatprep.subr.mxu0 0.0
    %520 = vmatpush1.msra.mxu0 0.0
    %521 = vmatprep.subr.mxu0 0.0
    %522 = vmatpush1.msra.mxu0 0.0
    %523 = vmatprep.subr.mxu0 0.0
    %524 = vmatpush1.msra.mxu0 0.0
    %525 = vmatprep.subr.mxu0 0.0
    %526 = vmatpush1.msra.mxu0 0.0
    %527 = vmatprep.subr.mxu0 0.0
    %528 = vmatpush1.msra.mxu0 0.0
    %529 = vmatprep.subr.mxu0 0.0
    %530 = vmatpush1.msra.mxu0 0.0
    %531 = vmatprep.subr.mxu0 0.0
    %532 = vmatpush1.msra.mxu0 0.0
    %533 = vmatprep.subr.mxu0 0.0
    %534 = vmatpush1.msra.mxu0 0.0
    %535 = vmatprep.subr.mxu0 0.0
    %536 = vmatpush1.msra.mxu0 0.0
    %537 = vmatprep.subr.mxu0 0.0
    %538 = vmatpush1.msra.mxu0 0.0
    %539 = vmatprep.subr.mxu0 0.0
    %540 = vmatpush1.msra.mxu0 0.0
    %541 = vmatprep.subr.mxu0 0.0
    %542 = vmatpush1.msra.mxu0 0.0
    %543 = vmatprep.subr.mxu0 0.0
    %544 = vmatpush1.msra.mxu0 0.0
    %545 = vmatprep.subr.mxu0 0.0
    %546 = vmatpush1.msra.mxu0 0.0
    %547 = vmatprep.subr.mxu0 0.0
    %548 = vmatpush1.msra.mxu0 0.0
    %549 = vmatprep.subr.mxu0 0.0
    %550 = vmatpush1.msra.mxu0 0.0
    %551 = vmatprep.subr.mxu0 0.0
    %552 = vmatpush1.msra.mxu0 0.0
    %553 = vmatprep.subr.mxu0 0.0
    %554 = vmatpush1.msra.mxu0 0.0
    %555 = vmatprep.subr.mxu0 0.0
    %556 = vmatpush1.msra.mxu0 0.0
    %557 = vmatprep.subr.mxu0 0.0
    %558 = vmatpush1.msra.mxu0 0.0
    %559 = vmatprep.subr.mxu0 0.0
    %560 = vmatpush1.msra.mxu0 0.0
    %561 = vmatprep.subr.mxu0 0.0
    %562 = vmatpush1.msra.mxu0 0.0
    %563 = vmatprep.mubr.f32.mxu0 0.0
    %564 = vmatmul.mubr.f32.gmra.mrb[0].mxu0 %v497
    %v565 = vpop.f32.mrb[0].mxu0
    %v566 = vadd.f32 %v493, %v565
    %v567 = vpop.f32.mrb[0].mxu0
    %568 = vdwg.mxu0
    %vm569 = vcmask 39936
    %v570 = vsel %vm569, %v566, -inf
    %571 = vmax.xlane.f32.xlu0 %v570
    %v572 = vpop.xlane.xlu0 %571
    %v573 = vsub.f32 %v566, %v572
    %v574 = vmul.f32 %v573, 1.442695
    %v575 = vpow.pop %v574
    %v576 = vsel %vm569, %v575, 0.0
    %577 = vadd.xlane.f32.xlu0 %v576
    %v578 = vpop.xlane.xlu0 %577
    %v579 = vrcp.pop %v578
    %v580 = vmul.f32 %v578, %v579
    %v581 = vsub.f32 2.0, %v580
    %v582 = vmul.f32 %v579, %v581
    %v583 = vmul.f32 %v575, %v582
    %v584 = vld [vmem:[#allocation7 + $0x68] sm:$0x1f]
    %v586 = vsel %vm569, %v583, 0
    %vm588 = vcmask 1044480
    %v590 = vsel %vm588, %v584, 0
    %592 = vmatprep.subr.mxu0 0.0
    %593 = vmatpush1.msra.mxu0 %v590
    %594 = vmatprep.subr.mxu0 0.0
    %595 = vmatpush1.msra.mxu0 0.0
    %596 = vmatprep.subr.mxu0 0.0
    %597 = vmatpush1.msra.mxu0 0.0
    %598 = vmatprep.subr.mxu0 0.0
    %599 = vmatpush1.msra.mxu0 0.0
    %600 = vmatprep.subr.mxu0 0.0
    %601 = vmatpush1.msra.mxu0 0.0
    %602 = vmatprep.subr.mxu0 0.0
    %603 = vmatpush1.msra.mxu0 0.0
    %604 = vmatprep.subr.mxu0 0.0
    %605 = vmatpush1.msra.mxu0 0.0
    %606 = vmatprep.subr.mxu0 0.0
    %607 = vmatpush1.msra.mxu0 0.0
    %608 = vmatprep.subr.mxu0 0.0
    %609 = vmatpush1.msra.mxu0 0.0
    %610 = vmatprep.subr.mxu0 0.0
    %611 = vmatpush1.msra.mxu0 0.0
    %612 = vmatprep.subr.mxu0 0.0
    %613 = vmatpush1.msra.mxu0 0.0
    %614 = vmatprep.subr.mxu0 0.0
    %615 = vmatpush1.msra.mxu0 0.0
    %616 = vmatprep.subr.mxu0 0.0
    %617 = vmatpush1.msra.mxu0 0.0
    %618 = vmatprep.subr.mxu0 0.0
    %619 = vmatpush1.msra.mxu0 0.0
    %620 = vmatprep.subr.mxu0 0.0
    %621 = vmatpush1.msra.mxu0 0.0
    %622 = vmatprep.subr.mxu0 0.0
    %623 = vmatpush1.msra.mxu0 0.0
    %624 = vmatprep.subr.mxu0 0.0
    %625 = vmatpush1.msra.mxu0 0.0
    %626 = vmatprep.subr.mxu0 0.0
    %627 = vmatpush1.msra.mxu0 0.0
    %628 = vmatprep.subr.mxu0 0.0
    %629 = vmatpush1.msra.mxu0 0.0
    %630 = vmatprep.subr.mxu0 0.0
    %631 = vmatpush1.msra.mxu0 0.0
    %632 = vmatprep.subr.mxu0 0.0
    %633 = vmatpush1.msra.mxu0 0.0
    %634 = vmatprep.subr.mxu0 0.0
    %635 = vmatpush1.msra.mxu0 0.0
    %636 = vmatprep.subr.mxu0 0.0
    %637 = vmatpush1.msra.mxu0 0.0
    %638 = vmatprep.subr.mxu0 0.0
    %639 = vmatpush1.msra.mxu0 0.0
    %640 = vmatprep.subr.mxu0 0.0
    %641 = vmatpush1.msra.mxu0 0.0
    %642 = vmatprep.subr.mxu0 0.0
    %643 = vmatpush1.msra.mxu0 0.0
    %644 = vmatprep.subr.mxu0 0.0
    %645 = vmatpush1.msra.mxu0 0.0
    %646 = vmatprep.subr.mxu0 0.0
    %647 = vmatpush1.msra.mxu0 0.0
    %648 = vmatprep.subr.mxu0 0.0
    %649 = vmatpush1.msra.mxu0 0.0
    %650 = vmatprep.subr.mxu0 0.0
    %651 = vmatpush1.msra.mxu0 0.0
    %652 = vmatprep.subr.mxu0 0.0
    %653 = vmatpush1.msra.mxu0 0.0
    %654 = vmatprep.subr.mxu0 0.0
    %655 = vmatpush1.msra.mxu0 0.0
    %656 = vmatprep.mubr.f32.mxu0 0.0
    %657 = vmatmul.mubr.f32.gmra.mrb[0].mxu0 %v586
    %v658 = vpop.f32.mrb[0].mxu0
    %v659 = vadd.f32 0.0, %v658
    %v660 = vpop.f32.mrb[0].mxu0
    %661 = vdwg.mxu0
    %663 = vrot.lane.b32.xlu0 %v659, 32
    %v664 = vpop.permute.xlu0 %663
    %v666 = vadd.f32 %v176, %v664
    %v667 = vld [vmem:[#allocation8 + $0x30] sm:$0xff]
    %669 = vrot.lane.b32.xlu0 %v667, 32
    %v670 = vpop.permute.xlu0 %669
    %v672 = vadd.f32 %v666, %v670
    %v673 = vmax.f32 %v672, 0.0
    %v674 = vld [vmem:[#allocation7 + $0x70] sm:$0xff]
    %v675 = vld [vmem:[#allocation7 + $0x78] sm:$0xff]
    %v676 = vld [vmem:[#allocation7 + $0x80] sm:$0xff]
    %v677 = vld [vmem:[#allocation7 + $0x88] sm:$0xff]
    %v678 = vld [vmem:[#allocation8 + $0x38] sm:$0xff]
    %680 = vrot.lane.b32.xlu0 %v673, 96
    %v681 = vpop.permute.xlu0 %680
    %v682 = vsel %vm188, %v681, 0
    %684 = vmatprep.subr.mxu0 0.0
    %685 = vmatpush1.msra.mxu0 %v674
    %686 = vmatprep.subr.mxu0 0.0
    %687 = vmatpush1.msra.mxu0 %v675
    %688 = vmatprep.subr.mxu0 0.0
    %689 = vmatpush1.msra.mxu0 %v676
    %690 = vmatprep.subr.mxu0 0.0
    %691 = vmatpush1.msra.mxu0 %v677
    %692 = vmatprep.subr.mxu0 0.0
    %693 = vmatpush1.msra.mxu0 0.0
    %694 = vmatprep.subr.mxu0 0.0
    %695 = vmatpush1.msra.mxu0 0.0
    %696 = vmatprep.subr.mxu0 0.0
    %697 = vmatpush1.msra.mxu0 0.0
    %698 = vmatprep.subr.mxu0 0.0
    %699 = vmatpush1.msra.mxu0 0.0
    %700 = vmatprep.subr.mxu0 0.0
    %701 = vmatpush1.msra.mxu0 0.0
    %702 = vmatprep.subr.mxu0 0.0
    %703 = vmatpush1.msra.mxu0 0.0
    %704 = vmatprep.subr.mxu0 0.0
    %705 = vmatpush1.msra.mxu0 0.0
    %706 = vmatprep.subr.mxu0 0.0
    %707 = vmatpush1.msra.mxu0 0.0
    %708 = vmatprep.subr.mxu0 0.0
    %709 = vmatpush1.msra.mxu0 0.0
    %710 = vmatprep.subr.mxu0 0.0
    %711 = vmatpush1.msra.mxu0 0.0
    %712 = vmatprep.subr.mxu0 0.0
    %713 = vmatpush1.msra.mxu0 0.0
    %714 = vmatprep.subr.mxu0 0.0
    %715 = vmatpush1.msra.mxu0 0.0
    %716 = vmatprep.subr.mxu0 0.0
    %717 = vmatpush1.msra.mxu0 0.0
    %718 = vmatprep.subr.mxu0 0.0
    %719 = vmatpush1.msra.mxu0 0.0
    %720 = vmatprep.subr.mxu0 0.0
    %721 = vmatpush1.msra.mxu0 0.0
    %722 = vmatprep.subr.mxu0 0.0
    %723 = vmatpush1.msra.mxu0 0.0
    %724 = vmatprep.subr.mxu0 0.0
    %725 = vmatpush1.msra.mxu0 0.0
    %726 = vmatprep.subr.mxu0 0.0
    %727 = vmatpush1.msra.mxu0 0.0
    %728 = vmatprep.subr.mxu0 0.0
    %729 = vmatpush1.msra.mxu0 0.0
    %730 = vmatprep.subr.mxu0 0.0
    %731 = vmatpush1.msra.mxu0 0.0
    %732 = vmatprep.subr.mxu0 0.0
    %733 = vmatpush1.msra.mxu0 0.0
    %734 = vmatprep.subr.mxu0 0.0
    %735 = vmatpush1.msra.mxu0 0.0
    %736 = vmatprep.subr.mxu0 0.0
    %737 = vmatpush1.msra.mxu0 0.0
    %738 = vmatprep.subr.mxu0 0.0
    %739 = vmatpush1.msra.mxu0 0.0
    %740 = vmatprep.subr.mxu0 0.0
    %741 = vmatpush1.msra.mxu0 0.0
    %742 = vmatprep.subr.mxu0 0.0
    %743 = vmatpush1.msra.mxu0 0.0
    %744 = vmatprep.subr.mxu0 0.0
    %745 = vmatpush1.msra.mxu0 0.0
    %746 = vmatprep.subr.mxu0 0.0
    %747 = vmatpush1.msra.mxu0 0.0
    %748 = vmatprep.mubr.f32.mxu0 0.0
    %749 = vmatmul.mubr.f32.gmra.mrb[0].mxu0 %v682
    %v750 = vpop.f32.mrb[0].mxu0
    %v751 = vadd.f32 %v678, %v750
    %v752 = vpop.f32.mrb[0].mxu0
    %753 = vdwg.mxu0
    %v754 = vmax.f32 %v751, 0.0
    %v755 = vld [vmem:[#allocation7 + $0x90] sm:$0xff]
    %v756 = vld [vmem:[#allocation7 + $0x98] sm:$0xff]
    %v757 = vld [vmem:[#allocation7 + $0xa0] sm:$0xff]
    %v758 = vld [vmem:[#allocation7 + $0xa8] sm:$0xff]
    %v759 = vld [vmem:[#allocation8 + $0x40] sm:$0xff]
    %v761 = vsel %vm188, %v754, 0
    %763 = vmatprep.subr.mxu0 0.0
    %764 = vmatpush1.msra.mxu0 %v755
    %765 = vmatprep.subr.mxu0 0.0
    %766 = vmatpush1.msra.mxu0 %v756
    %767 = vmatprep.subr.mxu0 0.0
    %768 = vmatpush1.msra.mxu0 %v757
    %769 = vmatprep.subr.mxu0 0.0
    %770 = vmatpush1.msra.mxu0 %v758
    %771 = vmatprep.subr.mxu0 0.0
    %772 = vmatpush1.msra.mxu0 0.0
    %773 = vmatprep.subr.mxu0 0.0
    %774 = vmatpush1.msra.mxu0 0.0
    %775 = vmatprep.subr.mxu0 0.0
    %776 = vmatpush1.msra.mxu0 0.0
    %777 = vmatprep.subr.mxu0 0.0
    %778 = vmatpush1.msra.mxu0 0.0
    %779 = vmatprep.subr.mxu0 0.0
    %780 = vmatpush1.msra.mxu0 0.0
    %781 = vmatprep.subr.mxu0 0.0
    %782 = vmatpush1.msra.mxu0 0.0
    %783 = vmatprep.subr.mxu0 0.0
    %784 = vmatpush1.msra.mxu0 0.0
    %785 = vmatprep.subr.mxu0 0.0
    %786 = vmatpush1.msra.mxu0 0.0
    %787 = vmatprep.subr.mxu0 0.0
    %788 = vmatpush1.msra.mxu0 0.0
    %789 = vmatprep.subr.mxu0 0.0
    %790 = vmatpush1.msra.mxu0 0.0
    %791 = vmatprep.subr.mxu0 0.0
    %792 = vmatpush1.msra.mxu0 0.0
    %793 = vmatprep.subr.mxu0 0.0
    %794 = vmatpush1.msra.mxu0 0.0
    %795 = vmatprep.subr.mxu0 0.0
    %796 = vmatpush1.msra.mxu0 0.0
    %797 = vmatprep.subr.mxu0 0.0
    %798 = vmatpush1.msra.mxu0 0.0
    %799 = vmatprep.subr.mxu0 0.0
    %800 = vmatpush1.msra.mxu0 0.0
    %801 = vmatprep.subr.mxu0 0.0
    %802 = vmatpush1.msra.mxu0 0.0
    %803 = vmatprep.subr.mxu0 0.0
    %804 = vmatpush1.msra.mxu0 0.0
    %805 = vmatprep.subr.mxu0 0.0
    %806 = vmatpush1.msra.mxu0 0.0
    %807 = vmatprep.subr.mxu0 0.0
    %808 = vmatpush1.msra.mxu0 0.0
    %809 = vmatprep.subr.mxu0 0.0
    %810 = vmatpush1.msra.mxu0 0.0
    %811 = vmatprep.subr.mxu0 0.0
    %812 = vmatpush1.msra.mxu0 0.0
    %813 = vmatprep.subr.mxu0 0.0
    %814 = vmatpush1.msra.mxu0 0.0
    %815 = vmatprep.subr.mxu0 0.0
    %816 = vmatpush1.msra.mxu0 0.0
    %817 = vmatprep.subr.mxu0 0.0
    %818 = vmatpush1.msra.mxu0 0.0
    %819 = vmatprep.subr.mxu0 0.0
    %820 = vmatpush1.msra.mxu0 0.0
    %821 = vmatprep.subr.mxu0 0.0
    %822 = vmatpush1.msra.mxu0 0.0
    %823 = vmatprep.subr.mxu0 0.0
    %824 = vmatpush1.msra.mxu0 0.0
    %825 = vmatprep.subr.mxu0 0.0
    %826 = vmatpush1.msra.mxu0 0.0
    %827 = vmatprep.mubr.f32.mxu0 0.0
    %828 = vmatmul.mubr.f32.gmra.mrb[0].mxu0 %v761
    %v829 = vpop.f32.mrb[0].mxu0
    %v830 = vadd.f32 %v759, %v829
    %v831 = vpop.f32.mrb[0].mxu0
    %832 = vdwg.mxu0
    %v833 = vtanh.pop %v830
    %v834 = vld [vmem:[#allocation7 + $0xb0] sm:$0xff]
    %v835 = vld [vmem:[#allocation7 + $0xb8] sm:$0xff]
    %v836 = vld [vmem:[#allocation7 + $0xc0] sm:$0xff]
    %v837 = vld [vmem:[#allocation7 + $0xc8] sm:$0xff]
    %v838 = vld [vmem:[#allocation7 + $0xd0] sm:$0xff]
    %v839 = vld [vmem:[#allocation7 + $0xd8] sm:$0xff]
    %v840 = vld [vmem:[#allocation7 + $0xe0] sm:$0xff]
    %v841 = vld [vmem:[#allocation7 + $0xe8] sm:$0xff]
    %v842 = vld [vmem:[#allocation8 + $0x48] sm:$0xff]
    %vm843 = vcmask 523264
    %v845 = vsel %vm843, %v833, 0
    %847 = vmatprep.subr.mxu0 0.0
    %848 = vmatpush1.msra.mxu0 %v834
    %849 = vmatprep.subr.mxu0 0.0
    %850 = vmatpush1.msra.mxu0 %v835
    %851 = vmatprep.subr.mxu0 0.0
    %852 = vmatpush1.msra.mxu0 %v836
    %853 = vmatprep.subr.mxu0 0.0
    %854 = vmatpush1.msra.mxu0 %v837
    %855 = vmatprep.subr.mxu0 0.0
    %856 = vmatpush1.msra.mxu0 %v838
    %857 = vmatprep.subr.mxu0 0.0
    %858 = vmatpush1.msra.mxu0 %v839
    %859 = vmatprep.subr.mxu0 0.0
    %860 = vmatpush1.msra.mxu0 %v840
    %861 = vmatprep.subr.mxu0 0.0
    %862 = vmatpush1.msra.mxu0 %v841
    %863 = vmatprep.subr.mxu0 0.0
    %864 = vmatpush1.msra.mxu0 0.0
    %865 = vmatprep.subr.mxu0 0.0
    %866 = vmatpush1.msra.mxu0 0.0
    %867 = vmatprep.subr.mxu0 0.0
    %868 = vmatpush1.msra.mxu0 0.0
    %869 = vmatprep.subr.mxu0 0.0
    %870 = vmatpush1.msra.mxu0 0.0
    %871 = vmatprep.subr.mxu0 0.0
    %872 = vmatpush1.msra.mxu0 0.0
    %873 = vmatprep.subr.mxu0 0.0
    %874 = vmatpush1.msra.mxu0 0.0
    %875 = vmatprep.subr.mxu0 0.0
    %876 = vmatpush1.msra.mxu0 0.0
    %877 = vmatprep.subr.mxu0 0.0
    %878 = vmatpush1.msra.mxu0 0.0
    %879 = vmatprep.subr.mxu0 0.0
    %880 = vmatpush1.msra.mxu0 0.0
    %881 = vmatprep.subr.mxu0 0.0
    %882 = vmatpush1.msra.mxu0 0.0
    %883 = vmatprep.subr.mxu0 0.0
    %884 = vmatpush1.msra.mxu0 0.0
    %885 = vmatprep.subr.mxu0 0.0
    %886 = vmatpush1.msra.mxu0 0.0
    %887 = vmatprep.subr.mxu0 0.0
    %888 = vmatpush1.msra.mxu0 0.0
    %889 = vmatprep.subr.mxu0 0.0
    %890 = vmatpush1.msra.mxu0 0.0
    %891 = vmatprep.subr.mxu0 0.0
    %892 = vmatpush1.msra.mxu0 0.0
    %893 = vmatprep.subr.mxu0 0.0
    %894 = vmatpush1.msra.mxu0 0.0
    %895 = vmatprep.subr.mxu0 0.0
    %896 = vmatpush1.msra.mxu0 0.0
    %897 = vmatprep.subr.mxu0 0.0
    %898 = vmatpush1.msra.mxu0 0.0
    %899 = vmatprep.subr.mxu0 0.0
    %900 = vmatpush1.msra.mxu0 0.0
    %901 = vmatprep.subr.mxu0 0.0
    %902 = vmatpush1.msra.mxu0 0.0
    %903 = vmatprep.subr.mxu0 0.0
    %904 = vmatpush1.msra.mxu0 0.0
    %905 = vmatprep.subr.mxu0 0.0
    %906 = vmatpush1.msra.mxu0 0.0
    %907 = vmatprep.subr.mxu0 0.0
    %908 = vmatpush1.msra.mxu0 0.0
    %909 = vmatprep.subr.mxu0 0.0
    %910 = vmatpush1.msra.mxu0 0.0
    %911 = vmatprep.mubr.f32.mxu0 0.0
    %912 = vmatmul.mubr.f32.gmra.mrb[0].mxu0 %v845
    %v913 = vpop.f32.mrb[0].mxu0
    %v914 = vadd.f32 %v842, %v913
    %v915 = vpop.f32.mrb[0].mxu0
    %916 = vdwg.mxu0
    %v917 = vtanh.pop %v914
    %v918 = vld [vmem:[#allocation8 + $0x50] sm:$0xff]
    %920 = vrot.lane.b32.xlu0 %v918, 32
    %v921 = vpop.permute.xlu0 %920
    %v923 = vmul.f32 %v917, %v921
    %925 = vrot.lane.b32.xlu0 %v923, 96
    %v926 = vpop.permute.xlu0 %925
    %v928 = vsel %vm188, %v926, 0.0
    %929 = vadd.xlane.f32.xlu0 %v928
    %v930 = vpop.xlane.xlu0 %929
    %v931 = vld [vmem:[#allocation8 + $0x58] sm:$0xff]
    %v932 = vadd.f32 %v930, %v931
    %933 = vrot.lane.b32.xlu0 %v355, 64
    %v934 = vpop.permute.xlu0 %933
    %936 = vrot.lane.b32.xlu0 %v583, 72
    %v937 = vpop.permute.xlu0 %936
    %940 = vrot.lane.b32.xlu0 %v932, 77
    %v941 = vpop.permute.xlu0 %940
    %v943 = vsel %vm188, %v917, %v488
    %v944 = vsel %vm843, %v943, %v934
    %vm945 = vcmask 588800
    %v946 = vsel %vm945, %v944, %v937
    %vm947 = vcmask 629760
    %v948 = vsel %vm947, %v946, %v941
    %vm949 = vcmask 637952
    %v950 = vsel %vm949, %v948, 0.0
    %951 = vst [vmem:[#allocation10] sm:$0xff] %v950
    // Predicated region
    $region34: #{tpu_custom_call.1} parent=1 // pred_check
      _
    $region35: #{tpu_custom_call.1} parent=1 // pred_check_branch
      %953 = sbr.rel (0) target = $region37
    $region36: #{tpu_custom_call.1} parent=1 // pred_region
      %s955 = ssub.s32 128, 128
      %956 = vsyncadd [#allocation4], %s955
      %s958 = sshll.u32 [#allocation10], 4
      %s959 = int_to_ptr.vmem [resolvable:$true] %s958
      %961 = dma.vmem_to_hbm [thread:$0]  %s959, 128, %s4, [#allocation4]
    $region37: #{tpu_custom_call.1} parent=1 // pred_fallthru
      _
    // Predicated region
    $region38: #{tpu_custom_call.1} parent=1 // pred_check
      _
    $region39: #{tpu_custom_call.1} parent=1 // pred_check_branch
      %963 = sbr.rel (0) target = $region41
    $region40: #{tpu_custom_call.1} parent=1 // pred_region
      %964 = dma.done [#allocation4], 128
    $region41: #{tpu_custom_call.1} parent=1 // pred_fallthru
      _
    %965 = vsyncpa [#allocation3], 1
    %966 = vsyncpa [#allocation6], 1
    %967 = vsyncpa [#allocation9], 1
    %968 = vsyncpa [#allocation4], 1

</llo_original>
